<compile_context>
chip_gen: v7x
topology: tpu7x:2x2x1
jax: 0.10.0
libtpu: 0.0.40
codegen_flags: <defaults>
</compile_context>

<pallas_src>
import jax
import jax.numpy as jnp
from jax.experimental import pallas as pl
from jax.experimental.pallas import tpu as pltpu


def _rtucker_kernel(subj_ref, rel_ref, core_ref, e_ref, out_ref, x_ref):
    """One (batch tile i, entity tile j) grid step.

    subj_ref: (tb, r_ent)            f32   gathered subject embeddings
    rel_ref:  (tb, r_rel)            f32   gathered relation embeddings
    core_ref: (r_rel, r_ent, r_ent)  f32   full core tensor (grid constant)
    e_ref:    (tn, r_ent)            bf16  row-major block of the entity table
    out_ref:  (tb, tn)                      sigmoid scores
    x_ref:    (tb, r_ent)            bf16  VMEM scratch, persists across j
    """
    j = pl.program_id(1)

    # ---- Stage 1: hoisted out of the entity loop (runs once per batch tile).
    @pl.when(j == 0)
    def _():
        subj = subj_ref[...]                        # (tb, r_ent) f32
        rel = rel_ref[...]                          # (tb, r_rel) f32
        r_rel = rel.shape[1]
        x = jnp.zeros(subj.shape, jnp.float32)      # (tb, r_ent) f32 accumulator
        # x[d, c] = sum_a rel[d, a] * (subj @ core[a])[d, c]
        for a in range(r_rel):                      # r_rel is small & static
            sa = jnp.dot(subj, core_ref[a],
                         preferred_element_type=jnp.float32)   # (tb, r_ent) MXU
            x = x + rel[:, a:a + 1] * sa                         # VPU
        x_ref[...] = x.astype(x_ref.dtype)

    # ---- Stage 2: (tb, r_ent) x (tn, r_ent)^T -> (tb, tn), fused sigmoid.
    scores = jax.lax.dot_general(
        x_ref[...], e_ref[...],
        dimension_numbers=(((1,), (1,)), ((), ())),   # contract the r_ent dims
        preferred_element_type=jnp.float32)
    out_ref[...] = jax.nn.sigmoid(scores).astype(out_ref.dtype)


def _largest_divisor_leq(total, target):
    t = max(1, min(total, target))
    while total % t:
        t -= 1
    return t


def rtucker_forward(subject_idx, relation_idx, E, R, core, *,
                    tb=None, tn=512, out_dtype=jnp.float32):
    """Pallas implementation of R_TuckER's score_fn.

    E:    (n_entities, r_ent)    shared factor
    R:    (n_relations, r_rel)   regular factor
    core: (r_rel, r_ent, r_ent)  core tensor
    Returns sigmoid(scores) of shape (B, n_entities), dtype `out_dtype`
    (pass jnp.bfloat16 to halve the output HBM writeback if the consumer allows).
    """
    n_entities, r_ent = E.shape
    r_rel = core.shape[0]
    assert R.shape[1] == r_rel and core.shape[1:] == (r_ent, r_ent)
    B = subject_idx.shape[0]

    # Embedding gathers stay in plain JAX (tiny, gather-shaped work).
    subjects = E[subject_idx].astype(jnp.float32)     # (B, r_ent)
    relations = R[relation_idx].astype(jnp.float32)   # (B, r_rel)

    # Stream the entity table in bf16: halves the dominant repeated HBM read
    # of the scoring matmul; the MXU accumulates in f32.
    # TODO(synk): in a real training/serving loop cache this bf16 copy across
    # calls instead of re-casting every forward.
    E_bf16 = E.astype(jnp.bfloat16)                   # (n_entities, r_ent), row-major

    if tb is None:
        tb = _largest_divisor_leq(B, 256)
    tn = _largest_divisor_leq(n_entities, tn)
    assert B % tb == 0 and n_entities % tn == 0

    grid = (B // tb, n_entities // tn)   # i: batch tiles, j: entity tiles (innermost)

    return pl.pallas_call(
        _rtucker_kernel,
        out_shape=jax.ShapeDtypeStruct((B, n_entities), out_dtype),
        grid_spec=pltpu.PrefetchScalarGridSpec(
            num_scalar_prefetch=0,
            grid=grid,
            in_specs=[
                pl.BlockSpec((tb, r_ent), lambda i, j: (i, 0)),               # subjects
                pl.BlockSpec((tb, r_rel), lambda i, j: (i, 0)),               # relations
                pl.BlockSpec((r_rel, r_ent, r_ent), lambda i, j: (0, 0, 0)),  # core (grid const)
                pl.BlockSpec((tn, r_ent), lambda i, j: (j, 0)),               # E rows, bf16
            ],
            out_specs=pl.BlockSpec((tb, tn), lambda i, j: (i, j)),
            scratch_shapes=[pltpu.VMEM((tb, r_ent), jnp.bfloat16)],           # x, carried over j
        ),
        compiler_params=pltpu.CompilerParams(
            # Batch tiles shard across TensorCores (v7x megacore); the entity
            # axis is a carried loop because the x scratch persists across it.
            dimension_semantics=("parallel", "arbitrary"),
        ),
    )(subjects, relations, core.astype(jnp.float32), E_bf16)


def _reference(subject_idx, relation_idx, E, R, core):
    relations = R[relation_idx]
    subjects = E[subject_idx]
    preds = jnp.einsum("abc,da->dbc", core, relations)
    preds = jnp.einsum("db,dbc->dc", subjects, preds)
    preds = preds @ E.T
    return jax.nn.sigmoid(preds)


if __name__ == "__main__":
    # Small synthetic config consistent with the module:
    #   data_count = (n_entities, n_relations), rank = (r_rel, r_ent, r_ent)
    # Chosen so n_entities >= r_ent and n_relations >= r_rel: the reduced QR in
    # init() then preserves the embedding shapes (the previous run crashed
    # because QR of a (12, 16) R shrank it to (12, 12)).
    n_entities, n_relations = 1024, 12
    r_rel, r_ent = 8, 32
    batch = 8

    key = jax.random.PRNGKey(0)
    k_e, k_r, k_c, k_s, k_p = jax.random.split(key, 5)

    # Deterministic init mirroring R_TuckER.init():
    #   xavier_normal_ for E, R; xavier_uniform_ for core; QR-orthogonalise E, R.
    std_e = (2.0 / (n_entities + r_ent)) ** 0.5
    std_r = (2.0 / (n_relations + r_rel)) ** 0.5
    E = std_e * jax.random.normal(k_e, (n_entities, r_ent), dtype=jnp.float32)
    R = std_r * jax.random.normal(k_r, (n_relations, r_rel), dtype=jnp.float32)
    lim_c = (6.0 / (r_rel + r_ent * r_ent)) ** 0.5
    core = jax.random.uniform(
        k_c, (r_rel, r_ent, r_ent), dtype=jnp.float32, minval=-lim_c, maxval=lim_c
    )
    E = jnp.linalg.qr(E)[0]
    R = jnp.linalg.qr(R)[0]

    subject_idx = jax.random.randint(k_s, (batch,), 0, n_entities)
    relation_idx = jax.random.randint(k_p, (batch,), 0, n_relations)

    out = rtucker_forward(subject_idx, relation_idx, E, R, core)
    out = jax.block_until_ready(out)

    ref = _reference(subject_idx, relation_idx, E, R, core)
    assert out.shape == (batch, n_entities)
    # E / x are streamed through the MXU in bf16 (f32 accumulation), so compare
    # at a bf16-appropriate tolerance against the pure-f32 reference.
    assert jnp.max(jnp.abs(out.astype(jnp.float32) - ref)) < 2e-3

    print("KERNEL_OK")
</pallas_src>

<mosaic_0001>
module attributes {stable_mosaic.version = 11 : i64} {
  func.func @_rtucker_kernel(%arg0: i32, %arg1: i32, %arg2: memref<8x32xf32, #tpu.memory_space<vmem>>, %arg3: memref<8x8xf32, #tpu.memory_space<vmem>>, %arg4: memref<8x32x32xf32, #tpu.memory_space<vmem>>, %arg5: memref<512x32xbf16, #tpu.memory_space<vmem>>, %arg6: memref<8x512xf32, #tpu.memory_space<vmem>>, %arg7: memref<8x32xbf16, #tpu.memory_space<vmem>>) attributes {dimension_semantics = [#tpu.dimension_semantics<parallel>, #tpu.dimension_semantics<arbitrary>], iteration_bounds = array<i64: 1, 2>, scalar_prefetch = 0 : i64, scratch_operands = 1 : i64, tpu.core_type = #tpu.core_type<tc>, window_params = [{transform_indices = @transform_0, window_bounds = array<i64: 8, 32>}, {transform_indices = @transform_1, window_bounds = array<i64: 8, 8>}, {pipeline_mode = #tpu.pipeline_mode<synchronous>, transform_indices = @transform_2, window_bounds = array<i64: 8, 32, 32>}, {transform_indices = @transform_3, window_bounds = array<i64: 512, 32>}, {transform_indices = @transform_4, window_bounds = array<i64: 8, 512>}]} {
    %c0_i32 = arith.constant 0 : i32
    %0 = arith.cmpi eq, %arg1, %c0_i32 : i32
    %1 = arith.extui %0 : i1 to i32
    %c0_i32_0 = arith.constant 0 : i32
    %2 = arith.cmpi ne, %1, %c0_i32_0 : i32
    scf.if %2 {
      %c0_7 = arith.constant 0 : index
      %c0_8 = arith.constant 0 : index
      %12 = vector.load %arg2[%c0_7, %c0_8] : memref<8x32xf32, #tpu.memory_space<vmem>>, vector<8x32xf32>
      %c0_9 = arith.constant 0 : index
      %c0_10 = arith.constant 0 : index
      %13 = vector.load %arg3[%c0_9, %c0_10] : memref<8x8xf32, #tpu.memory_space<vmem>>, vector<8x8xf32>
      %cst_11 = arith.constant 0.000000e+00 : f32
      %14 = vector.broadcast %cst_11 : f32 to vector<8x32xf32>
      %c0_12 = arith.constant 0 : index
      %c0_13 = arith.constant 0 : index
      %c0_14 = arith.constant 0 : index
      %15 = vector.load %arg4[%c0_12, %c0_13, %c0_14] : memref<8x32x32xf32, #tpu.memory_space<vmem>>, vector<1x32x32xf32>
      %16 = vector.shape_cast %15 : vector<1x32x32xf32> to vector<32x32xf32>
      %cst_15 = arith.constant dense<0.000000e+00> : vector<8x32xf32>
      %17 = tpu.matmul %12, %16, %cst_15 {dimension_numbers = #tpu.dot_dimension_numbers<[1], [0], [0], [1], [0, 0, 1, 1], [], []>} : vector<8x32xf32>, vector<32x32xf32>, vector<8x32xf32> -> vector<8x32xf32>
      %18 = vector.extract_strided_slice %13 {offsets = [0, 0], sizes = [8, 1], strides = [1, 1]} : vector<8x8xf32> to vector<8x1xf32>
      %19 = vector.broadcast %18 : vector<8x1xf32> to vector<8x32xf32>
      %20 = arith.mulf %19, %17 : vector<8x32xf32>
      %21 = arith.addf %14, %20 : vector<8x32xf32>
      %c1 = arith.constant 1 : index
      %c0_16 = arith.constant 0 : index
      %c0_17 = arith.constant 0 : index
      %22 = vector.load %arg4[%c1, %c0_16, %c0_17] : memref<8x32x32xf32, #tpu.memory_space<vmem>>, vector<1x32x32xf32>
      %23 = vector.shape_cast %22 : vector<1x32x32xf32> to vector<32x32xf32>
      %cst_18 = arith.constant dense<0.000000e+00> : vector<8x32xf32>
      %24 = tpu.matmul %12, %23, %cst_18 {dimension_numbers = #tpu.dot_dimension_numbers<[1], [0], [0], [1], [0, 0, 1, 1], [], []>} : vector<8x32xf32>, vector<32x32xf32>, vector<8x32xf32> -> vector<8x32xf32>
      %25 = vector.extract_strided_slice %13 {offsets = [0, 1], sizes = [8, 1], strides = [1, 1]} : vector<8x8xf32> to vector<8x1xf32>
      %26 = vector.broadcast %25 : vector<8x1xf32> to vector<8x32xf32>
      %27 = arith.mulf %26, %24 : vector<8x32xf32>
      %28 = arith.addf %21, %27 : vector<8x32xf32>
      %c2 = arith.constant 2 : index
      %c0_19 = arith.constant 0 : index
      %c0_20 = arith.constant 0 : index
      %29 = vector.load %arg4[%c2, %c0_19, %c0_20] : memref<8x32x32xf32, #tpu.memory_space<vmem>>, vector<1x32x32xf32>
      %30 = vector.shape_cast %29 : vector<1x32x32xf32> to vector<32x32xf32>
      %cst_21 = arith.constant dense<0.000000e+00> : vector<8x32xf32>
      %31 = tpu.matmul %12, %30, %cst_21 {dimension_numbers = #tpu.dot_dimension_numbers<[1], [0], [0], [1], [0, 0, 1, 1], [], []>} : vector<8x32xf32>, vector<32x32xf32>, vector<8x32xf32> -> vector<8x32xf32>
      %32 = vector.extract_strided_slice %13 {offsets = [0, 2], sizes = [8, 1], strides = [1, 1]} : vector<8x8xf32> to vector<8x1xf32>
      %33 = vector.broadcast %32 : vector<8x1xf32> to vector<8x32xf32>
      %34 = arith.mulf %33, %31 : vector<8x32xf32>
      %35 = arith.addf %28, %34 : vector<8x32xf32>
      %c3 = arith.constant 3 : index
      %c0_22 = arith.constant 0 : index
      %c0_23 = arith.constant 0 : index
      %36 = vector.load %arg4[%c3, %c0_22, %c0_23] : memref<8x32x32xf32, #tpu.memory_space<vmem>>, vector<1x32x32xf32>
      %37 = vector.shape_cast %36 : vector<1x32x32xf32> to vector<32x32xf32>
      %cst_24 = arith.constant dense<0.000000e+00> : vector<8x32xf32>
      %38 = tpu.matmul %12, %37, %cst_24 {dimension_numbers = #tpu.dot_dimension_numbers<[1], [0], [0], [1], [0, 0, 1, 1], [], []>} : vector<8x32xf32>, vector<32x32xf32>, vector<8x32xf32> -> vector<8x32xf32>
      %39 = vector.extract_strided_slice %13 {offsets = [0, 3], sizes = [8, 1], strides = [1, 1]} : vector<8x8xf32> to vector<8x1xf32>
      %40 = vector.broadcast %39 : vector<8x1xf32> to vector<8x32xf32>
      %41 = arith.mulf %40, %38 : vector<8x32xf32>
      %42 = arith.addf %35, %41 : vector<8x32xf32>
      %c4 = arith.constant 4 : index
      %c0_25 = arith.constant 0 : index
      %c0_26 = arith.constant 0 : index
      %43 = vector.load %arg4[%c4, %c0_25, %c0_26] : memref<8x32x32xf32, #tpu.memory_space<vmem>>, vector<1x32x32xf32>
      %44 = vector.shape_cast %43 : vector<1x32x32xf32> to vector<32x32xf32>
      %cst_27 = arith.constant dense<0.000000e+00> : vector<8x32xf32>
      %45 = tpu.matmul %12, %44, %cst_27 {dimension_numbers = #tpu.dot_dimension_numbers<[1], [0], [0], [1], [0, 0, 1, 1], [], []>} : vector<8x32xf32>, vector<32x32xf32>, vector<8x32xf32> -> vector<8x32xf32>
      %46 = vector.extract_strided_slice %13 {offsets = [0, 4], sizes = [8, 1], strides = [1, 1]} : vector<8x8xf32> to vector<8x1xf32>
      %47 = vector.broadcast %46 : vector<8x1xf32> to vector<8x32xf32>
      %48 = arith.mulf %47, %45 : vector<8x32xf32>
      %49 = arith.addf %42, %48 : vector<8x32xf32>
      %c5 = arith.constant 5 : index
      %c0_28 = arith.constant 0 : index
      %c0_29 = arith.constant 0 : index
      %50 = vector.load %arg4[%c5, %c0_28, %c0_29] : memref<8x32x32xf32, #tpu.memory_space<vmem>>, vector<1x32x32xf32>
      %51 = vector.shape_cast %50 : vector<1x32x32xf32> to vector<32x32xf32>
      %cst_30 = arith.constant dense<0.000000e+00> : vector<8x32xf32>
      %52 = tpu.matmul %12, %51, %cst_30 {dimension_numbers = #tpu.dot_dimension_numbers<[1], [0], [0], [1], [0, 0, 1, 1], [], []>} : vector<8x32xf32>, vector<32x32xf32>, vector<8x32xf32> -> vector<8x32xf32>
      %53 = vector.extract_strided_slice %13 {offsets = [0, 5], sizes = [8, 1], strides = [1, 1]} : vector<8x8xf32> to vector<8x1xf32>
      %54 = vector.broadcast %53 : vector<8x1xf32> to vector<8x32xf32>
      %55 = arith.mulf %54, %52 : vector<8x32xf32>
      %56 = arith.addf %49, %55 : vector<8x32xf32>
      %c6 = arith.constant 6 : index
      %c0_31 = arith.constant 0 : index
      %c0_32 = arith.constant 0 : index
      %57 = vector.load %arg4[%c6, %c0_31, %c0_32] : memref<8x32x32xf32, #tpu.memory_space<vmem>>, vector<1x32x32xf32>
      %58 = vector.shape_cast %57 : vector<1x32x32xf32> to vector<32x32xf32>
      %cst_33 = arith.constant dense<0.000000e+00> : vector<8x32xf32>
      %59 = tpu.matmul %12, %58, %cst_33 {dimension_numbers = #tpu.dot_dimension_numbers<[1], [0], [0], [1], [0, 0, 1, 1], [], []>} : vector<8x32xf32>, vector<32x32xf32>, vector<8x32xf32> -> vector<8x32xf32>
      %60 = vector.extract_strided_slice %13 {offsets = [0, 6], sizes = [8, 1], strides = [1, 1]} : vector<8x8xf32> to vector<8x1xf32>
      %61 = vector.broadcast %60 : vector<8x1xf32> to vector<8x32xf32>
      %62 = arith.mulf %61, %59 : vector<8x32xf32>
      %63 = arith.addf %56, %62 : vector<8x32xf32>
      %c7 = arith.constant 7 : index
      %c0_34 = arith.constant 0 : index
      %c0_35 = arith.constant 0 : index
      %64 = vector.load %arg4[%c7, %c0_34, %c0_35] : memref<8x32x32xf32, #tpu.memory_space<vmem>>, vector<1x32x32xf32>
      %65 = vector.shape_cast %64 : vector<1x32x32xf32> to vector<32x32xf32>
      %cst_36 = arith.constant dense<0.000000e+00> : vector<8x32xf32>
      %66 = tpu.matmul %12, %65, %cst_36 {dimension_numbers = #tpu.dot_dimension_numbers<[1], [0], [0], [1], [0, 0, 1, 1], [], []>} : vector<8x32xf32>, vector<32x32xf32>, vector<8x32xf32> -> vector<8x32xf32>
      %67 = vector.extract_strided_slice %13 {offsets = [0, 7], sizes = [8, 1], strides = [1, 1]} : vector<8x8xf32> to vector<8x1xf32>
      %68 = vector.broadcast %67 : vector<8x1xf32> to vector<8x32xf32>
      %69 = arith.mulf %68, %66 : vector<8x32xf32>
      %70 = arith.addf %63, %69 : vector<8x32xf32>
      %71 = arith.truncf %70 : vector<8x32xf32> to vector<8x32xbf16>
      %c0_37 = arith.constant 0 : index
      %c0_38 = arith.constant 0 : index
      %72 = vector.load %arg7[%c0_37, %c0_38] : memref<8x32xbf16, #tpu.memory_space<vmem>>, vector<8x32xbf16>
      tpu.vector_store %arg7[%c0_37, %c0_38], %71 {strides = array<i32>} : memref<8x32xbf16, #tpu.memory_space<vmem>>, vector<8x32xbf16>,
    } else {
    }
    %c0 = arith.constant 0 : index
    %c0_1 = arith.constant 0 : index
    %3 = vector.load %arg7[%c0, %c0_1] : memref<8x32xbf16, #tpu.memory_space<vmem>>, vector<8x32xbf16>
    %c0_2 = arith.constant 0 : index
    %c0_3 = arith.constant 0 : index
    %4 = vector.load %arg5[%c0_2, %c0_3] : memref<512x32xbf16, #tpu.memory_space<vmem>>, vector<512x32xbf16>
    %cst = arith.constant dense<0.000000e+00> : vector<8x512xf32>
    %5 = tpu.matmul %3, %4, %cst {dimension_numbers = #tpu.dot_dimension_numbers<[1], [1], [0], [0], [0, 0, 1, 0], [], []>} : vector<8x32xbf16>, vector<512x32xbf16>, vector<8x512xf32> -> vector<8x512xf32>
    %6 = arith.negf %5 : vector<8x512xf32>
    %7 = math.exp %6 : vector<8x512xf32>
    %cst_4 = arith.constant 1.000000e+00 : f32
    %8 = vector.broadcast %cst_4 : f32 to vector<8x512xf32>
    %9 = arith.addf %8, %7 : vector<8x512xf32>
    %10 = arith.divf %8, %9 : vector<8x512xf32>
    %c0_5 = arith.constant 0 : index
    %c0_6 = arith.constant 0 : index
    %11 = vector.load %arg6[%c0_5, %c0_6] : memref<8x512xf32, #tpu.memory_space<vmem>>, vector<8x512xf32>
    tpu.vector_store %arg6[%c0_5, %c0_6], %10 {strides = array<i32>} : memref<8x512xf32, #tpu.memory_space<vmem>>, vector<8x512xf32>,
    return
  }
  func.func @transform_0(%arg0: i32, %arg1: i32) -> (i32, i32) {
    %c0_i32 = arith.constant 0 : i32
    %c0_i32_0 = arith.constant 0 : i32
    return %arg0, %c0_i32 : i32, i32
  }
  func.func @transform_1(%arg0: i32, %arg1: i32) -> (i32, i32) {
    %c0_i32 = arith.constant 0 : i32
    %c0_i32_0 = arith.constant 0 : i32
    return %arg0, %c0_i32 : i32, i32
  }
  func.func @transform_2(%arg0: i32, %arg1: i32) -> (i32, i32, i32) {
    %c0_i32 = arith.constant 0 : i32
    %c0_i32_0 = arith.constant 0 : i32
    %c0_i32_1 = arith.constant 0 : i32
    %c0_i32_2 = arith.constant 0 : i32
    return %c0_i32, %c0_i32_0, %c0_i32_1 : i32, i32, i32
  }
  func.func @transform_3(%arg0: i32, %arg1: i32) -> (i32, i32) {
    %c0_i32 = arith.constant 0 : i32
    %c0_i32_0 = arith.constant 0 : i32
    return %arg1, %c0_i32 : i32, i32
  }
  func.func @transform_4(%arg0: i32, %arg1: i32) -> (i32, i32) {
    %c0_i32 = arith.constant 0 : i32
    return %arg0, %arg1 : i32, i32
  }
}

</mosaic_0001>

<llo_original>
// kernel: tpu_custom_call.1
$region0: #{tpu_custom_call.1}
  #allocation0 [shape = 'u32[]', space=smem, size = 0x4, offset = 0x4, fixed_abs, tag = 'smem constant byte address 0x4 - core index']
  #allocation1 [shape = 'u32[144,128]{1,0:T(1,128)}', space=vmem, size = 0x12000, scoped, tag = 'internal scratch']
  #allocation2 [shape = 'bf16[8,32]{1,0:T(8,128)(2,1)}', space=vmem, size = 0x800, scoped, tag = 'scratch operand']
  %s0 = inlined_call_operand.vmem [shape: f32[8,32], index: 0, kind: input, shape index: {}]
  %s1 = inlined_call_operand.vmem [shape: f32[8,8], index: 1, kind: input, shape index: {}]
  %s2 = inlined_call_operand.vmem [shape: f32[8,32,32], index: 2, kind: input, shape index: {}]
  %s3 = inlined_call_operand.vmem [shape: bf16[1024,32], index: 3, kind: input, shape index: {}]
  %s4 = inlined_call_operand.hbm [shape: f32[8,1024], index: 4, kind: output, shape index: {}]
  %s5 = sld [smem:[#allocation0]]
  $region53: #{tpu_custom_call.1} parent=0
    _
  %s7 = ssub.s32 1, %s5
  %s8 = scalar_select 0, %s7, %s5
  $region1: #{tpu_custom_call.1} parent=0
    #allocation3 [shape = 'u8[32768]{0}', space=vmem, size = 0x8000, scoped, tag = 'output window, operand 0']
    #allocation4 [shape = 's32[2]{0}', space=sflag, size = 0x8, scoped, tag = 'scoped memory for tpu_custom_call.1']
    %9 = vsyncpa [#allocation4], 0
    %s10 = scalar_lea.sflag [#allocation4], 1
    %11 = vsyncpa %s10, 0
    loop: start=0, step=1, limit=4
    $region2: #{tpu_custom_call.1} parent=1 // loop_pre_header
      _
    $region3: #{tpu_custom_call.1} parent=1 // loop_header
      %s13 = sphi 0, %s17
      %p14 = scmp.ge.s32.totalorder %s13, 4
      %s20 = sphi 0, %s32
      %s21 = sphi 0, %s28
      %s22 = sphi 0, %s20
      %s23 = sphi 0, %s21
      %s24 = sphi 0, %s22
      %s25 = sphi 0, %s23
      %s35 = sphi 0, %s37
      %s38 = sphi 0, %s35
      %s39 = sphi 0, %s38
      %s55 = sphi 0, %s39
      %s61 = sphi 0, %s63
      %s64 = sphi 0, %s61
      %s65 = sphi 0, %s64
      %s81 = sphi 0, %s65
      %s85 = sphi 0, %s85
      %s87 = sphi 0, %s85
      %s88 = sphi 0, %s87
      %s102 = sphi 0, %s88
      %s108 = sphi 0, %s110
      %s111 = sphi 0, %s108
      %s112 = sphi 0, %s111
      %s128 = sphi 0, %s112
      %s136 = sphi 0, %s138
      %s139 = sphi 0, %s136
      %s140 = sphi 0, %s139
      %s156 = sphi 0, %s140
    $region4: #{tpu_custom_call.1} parent=1 // loop_header_branch
      %16 = sbr.rel (%p14) target = $region8
    $region5: #{tpu_custom_call.1} parent=1 // loop_body
      %s18 = ssub.s32 %s13, 1
      %s19 = ssub.s32 %s13, 2
      %s26 = sadd.s32 1, %s21
      %p27 = scmp.ge.s32.totalorder %s26, 2
      %s28 = scalar_select %p27, 0, %s26
      %s29 = sadd.s32 1, %s20
      %s30 = scalar_select %p27, %s29, %s20
      %p31 = scmp.ge.s32.totalorder %s30, 1
      %s32 = scalar_select %p31, 0, %s30
      %s33 = ssub.s32 %s20, %s32
      %p34 = scmp.eq.s32.totalorder %s33, 0
      %s36 = sadd.s32 %s35, 1
      %s37 = scalar_select %p34, %s35, %s36
      %p40 = pneg %p34
      %p41 = scmp.eq.s32.totalorder %s13, 1
      %p42 = por %p40, %p41
      %p43 = scmp.ne.s32.totalorder %s35, %s38
      %p44 = scmp.eq.s32.totalorder %s13, 0
      %p45 = por %p43, %p44
      %p46 = scmp.ne.s32.totalorder %s35, %s38
      %p47 = scmp.eq.s32.totalorder %s18, 1
      %p48 = por %p46, %p47
      %p49 = scmp.ne.s32.totalorder %s38, %s39
      %p50 = scmp.eq.s32.totalorder %s18, 0
      %p51 = por %p49, %p50
      %p52 = scmp.ne.s32.totalorder %s38, %s39
      %p53 = scmp.eq.s32.totalorder %s19, 1
      %p54 = por %p52, %p53
      %p56 = scmp.ne.s32.totalorder %s39, %s55
      %p57 = scmp.eq.s32.totalorder %s19, 0
      %p58 = por %p56, %p57
      %s59 = ssub.s32 %s20, %s32
      %p60 = scmp.eq.s32.totalorder %s59, 0
      %s62 = sadd.s32 %s61, 1
      %s63 = scalar_select %p60, %s61, %s62
      %p66 = pneg %p60
      %p67 = scmp.eq.s32.totalorder %s13, 1
      %p68 = por %p66, %p67
      %p69 = scmp.ne.s32.totalorder %s61, %s64
      %p70 = scmp.eq.s32.totalorder %s13, 0
      %p71 = por %p69, %p70
      %p72 = scmp.ne.s32.totalorder %s61, %s64
      %p73 = scmp.eq.s32.totalorder %s18, 1
      %p74 = por %p72, %p73
      %p75 = scmp.ne.s32.totalorder %s64, %s65
      %p76 = scmp.eq.s32.totalorder %s18, 0
      %p77 = por %p75, %p76
      %p78 = scmp.ne.s32.totalorder %s64, %s65
      %p79 = scmp.eq.s32.totalorder %s19, 1
      %p80 = por %p78, %p79
      %p82 = scmp.ne.s32.totalorder %s65, %s81
      %p83 = scmp.eq.s32.totalorder %s19, 0
      %p84 = por %p82, %p83
      %s86 = sadd.s32 %s85, 1
      %p89 = scmp.eq.s32.totalorder %s13, 1
      %p90 = scmp.ne.s32.totalorder %s85, %s87
      %p91 = scmp.eq.s32.totalorder %s13, 0
      %p92 = por %p90, %p91
      %p93 = scmp.ne.s32.totalorder %s85, %s87
      %p94 = scmp.eq.s32.totalorder %s18, 1
      %p95 = por %p93, %p94
      %p96 = scmp.ne.s32.totalorder %s87, %s88
      %p97 = scmp.eq.s32.totalorder %s18, 0
      %p98 = por %p96, %p97
      %p99 = scmp.ne.s32.totalorder %s87, %s88
      %p100 = scmp.eq.s32.totalorder %s19, 1
      %p101 = por %p99, %p100
      %p103 = scmp.ne.s32.totalorder %s88, %s102
      %p104 = scmp.eq.s32.totalorder %s19, 0
      %p105 = por %p103, %p104
      %s106 = ssub.s32 %s21, %s28
      %p107 = scmp.eq.s32.totalorder %s106, 0
      %s109 = sadd.s32 %s108, 1
      %s110 = scalar_select %p107, %s108, %s109
      %p113 = pneg %p107
      %p114 = scmp.eq.s32.totalorder %s13, 1
      %p115 = por %p113, %p114
      %p116 = scmp.ne.s32.totalorder %s108, %s111
      %p117 = scmp.eq.s32.totalorder %s13, 0
      %p118 = por %p116, %p117
      %p119 = scmp.ne.s32.totalorder %s108, %s111
      %p120 = scmp.eq.s32.totalorder %s18, 1
      %p121 = por %p119, %p120
      %p122 = scmp.ne.s32.totalorder %s111, %s112
      %p123 = scmp.eq.s32.totalorder %s18, 0
      %p124 = por %p122, %p123
      %p125 = scmp.ne.s32.totalorder %s111, %s112
      %p126 = scmp.eq.s32.totalorder %s19, 1
      %p127 = por %p125, %p126
      %p129 = scmp.ne.s32.totalorder %s112, %s128
      %p130 = scmp.eq.s32.totalorder %s19, 0
      %p131 = por %p129, %p130
      %s132 = ssub.s32 %s20, %s32
      %s133 = ssub.s32 %s21, %s28
      %s134 = sor.u32 %s132, %s133
      %p135 = scmp.eq.s32.totalorder %s134, 0
      %s137 = sadd.s32 %s136, 1
      %s138 = scalar_select %p135, %s136, %s137
      %p141 = pneg %p135
      %p142 = scmp.eq.s32.totalorder %s13, 1
      %p143 = por %p141, %p142
      %p144 = scmp.ne.s32.totalorder %s136, %s139
      %p145 = scmp.eq.s32.totalorder %s13, 0
      %p146 = por %p144, %p145
      %p147 = scmp.ne.s32.totalorder %s136, %s139
      %p148 = scmp.eq.s32.totalorder %s18, 1
      %p149 = por %p147, %p148
      %p150 = scmp.ne.s32.totalorder %s139, %s140
      %p151 = scmp.eq.s32.totalorder %s18, 0
      %p152 = por %p150, %p151
      %p153 = scmp.ne.s32.totalorder %s139, %s140
      %p154 = scmp.eq.s32.totalorder %s19, 1
      %p155 = por %p153, %p154
      %p157 = scmp.ne.s32.totalorder %s140, %s156
      %p158 = scmp.eq.s32.totalorder %s19, 0
      %p159 = por %p157, %p158
      %p160 = scmp.le.s32.totalorder 1, %s13
      %p161 = scmp.lt.s32.totalorder %s13, 3
      %p162 = pnand %p160, %p161
      %p163 = pneg %p162
      // Predicated region
      $region9: #{tpu_custom_call.1} parent=5 // pred_check
        _
      $region10: #{tpu_custom_call.1} parent=5 // pred_check_branch
        %165 = sbr.rel (%p162) target = $region12
      $region11: #{tpu_custom_call.1} parent=5 // pred_region
        %s166 = ssub.s32 %s13, 1
        // Predicated region
        $region13: #{tpu_custom_call.1} parent=11 // pred_check
          %p167 = pneg %p51
        $region14: #{tpu_custom_call.1} parent=11 // pred_check_branch
          %169 = sbr.rel (%p167) target = $region16
        $region15: #{tpu_custom_call.1} parent=11 // pred_region
          %p170 = scmp.lt.s32.totalorder %s22, 0
          %s171 = scalar_select %p170, %s22, 0
          %s172 = smul.addr %s171, 8
          %s173 = scalar_lea.vmem %s0, %s172
        $region16: #{tpu_custom_call.1} parent=11 // pred_fallthru
          _
        // Predicated region
        $region17: #{tpu_custom_call.1} parent=11 // pred_check
          %p174 = pneg %p77
        $region18: #{tpu_custom_call.1} parent=11 // pred_check_branch
          %176 = sbr.rel (%p174) target = $region20
        $region19: #{tpu_custom_call.1} parent=11 // pred_region
          %p177 = scmp.lt.s32.totalorder %s22, 0
          %s178 = scalar_select %p177, %s22, 0
          %s179 = smul.addr %s178, 8
          %s180 = scalar_lea.vmem %s1, %s179
        $region20: #{tpu_custom_call.1} parent=11 // pred_fallthru
          _
        // Predicated region
        $region21: #{tpu_custom_call.1} parent=11 // pred_check
          %p181 = pneg %p98
        $region22: #{tpu_custom_call.1} parent=11 // pred_check_branch
          %183 = sbr.rel (%p181) target = $region24
        $region23: #{tpu_custom_call.1} parent=11 // pred_region
          _
        $region24: #{tpu_custom_call.1} parent=11 // pred_fallthru
          _
      $region12: #{tpu_custom_call.1} parent=5 // pred_fallthru
        _
      %p184 = scmp.lt.s32.totalorder %s13, 2
      // Predicated region
      $region25: #{tpu_custom_call.1} parent=5 // pred_check
        %p185 = pneg %p184
      $region26: #{tpu_custom_call.1} parent=5 // pred_check_branch
        %187 = sbr.rel (%p185) target = $region28
      $region27: #{tpu_custom_call.1} parent=5 // pred_region
        // Predicated region
        $region29: #{tpu_custom_call.1} parent=27 // pred_check
          %p188 = pneg %p118
        $region30: #{tpu_custom_call.1} parent=27 // pred_check_branch
          %190 = sbr.rel (%p188) target = $region32
        $region31: #{tpu_custom_call.1} parent=27 // pred_region
          %s191 = smul.u32 64, %s21
          %p192 = scmp.lt.s32.totalorder %s191, 127
          %s193 = scalar_select %p192, %s191, 127
          %s194 = smul.addr %s193, 4
          %s195 = scalar_lea.vmem %s3, %s194
          %s196 = smul.u32 64, %s21
        $region32: #{tpu_custom_call.1} parent=27 // pred_fallthru
          _
      $region28: #{tpu_custom_call.1} parent=5 // pred_fallthru
        _
      %p197 = scmp.le.s32.totalorder 1, %s13
      %p198 = scmp.lt.s32.totalorder %s13, 3
      %p199 = pnand %p197, %p198
      %p200 = pneg %p199
      // Predicated region
      $region33: #{tpu_custom_call.1} parent=5 // pred_check
        _
      $region34: #{tpu_custom_call.1} parent=5 // pred_check_branch
        %202 = sbr.rel (%p199) target = $region36
      $region35: #{tpu_custom_call.1} parent=5 // pred_region
        %s203 = ssub.s32 %s13, 1
        %p204 = scmp.lt.s32.totalorder %s22, 0
        %s205 = scalar_select %p204, %s22, 0
        %s206 = smul.addr %s205, 8
        %s207 = scalar_lea.vmem %s0, %s206
        %p208 = pneg %p51
        %p209 = pneg %p48
        %p210 = scmp.lt.s32.totalorder %s22, 0
        %s211 = scalar_select %p210, %s22, 0
        %s212 = smul.addr %s211, 8
        %s213 = scalar_lea.vmem %s1, %s212
        %p214 = pneg %p77
        %p215 = pneg %p74
        %p216 = pneg %p98
        %p217 = pneg %p95
        %s218 = smul.u32 64, %s23
        %p219 = scmp.lt.s32.totalorder %s218, 127
        %s220 = scalar_select %p219, %s218, 127
        %s221 = smul.addr %s220, 4
        %s222 = scalar_lea.vmem %s3, %s221
        %p223 = pneg %p124
        %p224 = pneg %p121
        %p225 = pneg %p152
        %p226 = pneg %p149
        %s227 = sand.u32 %s139, 1
        %s228 = scalar_lea.sflag [#allocation4], %s227
        %s229 = sand.u32 %s139, 1
        %s230 = smul.addr %s229, 32
        %s231 = scalar_lea.vmem [#allocation3], %s230
        %p232 = scmp.lt.s32.totalorder %s22, 0
        %s233 = scalar_select %p232, %s22, 0
        %s234 = smul.addr %s233, 8
        %s235 = scalar_lea.vmem %s0, %s234
        %p236 = scmp.lt.s32.totalorder %s22, 0
        %s237 = scalar_select %p236, %s22, 0
        %s238 = smul.addr %s237, 8
        %s239 = scalar_lea.vmem %s1, %s238
        %s240 = smul.u32 64, %s23
        %p241 = scmp.lt.s32.totalorder %s240, 127
        %s242 = scalar_select %p241, %s240, 127
        %s243 = smul.addr %s242, 4
        %s244 = scalar_lea.vmem %s3, %s243
        %s245 = smul.u32 64, %s23
        %s246 = smul.u32 4, %s23
        %p248 = scmp.eq.s32.totalorder %s23, 0
        // Predicated region
        $region37: #{tpu_custom_call.1} parent=35 // pred_check
          %p249 = pneg %p248
        $region38: #{tpu_custom_call.1} parent=35 // pred_check_branch
          %251 = sbr.rel (%p249) target = $region40
        $region39: #{tpu_custom_call.1} parent=35 // pred_region
          %v252 = vld [vmem:[%s235] sm:$0xff]
          %v253 = vld [vmem:[%s239] sm:$0xff]
          %v254 = vld [vmem:[%s2] sm:$0xff]
          %v255 = vld [vmem:[%s2 + $0x8] sm:$0xff]
          %v256 = vld [vmem:[%s2 + $0x10] sm:$0xff]
          %v257 = vld [vmem:[%s2 + $0x18] sm:$0xff]
          %vm258 = vcmask 261120
          %v260 = vsel %vm258, %v252, 0
          %262 = vmatprep.subr.mxu0 0.0
          %263 = vmatpush1.msra.mxu0 %v254
          %264 = vmatprep.subr.mxu0 0.0
          %265 = vmatpush1.msra.mxu0 %v255
          %266 = vmatprep.subr.mxu0 0.0
          %267 = vmatpush1.msra.mxu0 %v256
          %268 = vmatprep.subr.mxu0 0.0
          %269 = vmatpush1.msra.mxu0 %v257
          %270 = vmatprep.subr.mxu0 0.0
          %271 = vmatpush1.msra.mxu0 0.0
          %272 = vmatprep.subr.mxu0 0.0
          %273 = vmatpush1.msra.mxu0 0.0
          %274 = vmatprep.subr.mxu0 0.0
          %275 = vmatpush1.msra.mxu0 0.0
          %276 = vmatprep.subr.mxu0 0.0
          %277 = vmatpush1.msra.mxu0 0.0
          %278 = vmatprep.subr.mxu0 0.0
          %279 = vmatpush1.msra.mxu0 0.0
          %280 = vmatprep.subr.mxu0 0.0
          %281 = vmatpush1.msra.mxu0 0.0
          %282 = vmatprep.subr.mxu0 0.0
          %283 = vmatpush1.msra.mxu0 0.0
          %284 = vmatprep.subr.mxu0 0.0
          %285 = vmatpush1.msra.mxu0 0.0
          %286 = vmatprep.subr.mxu0 0.0
          %287 = vmatpush1.msra.mxu0 0.0
          %288 = vmatprep.subr.mxu0 0.0
          %289 = vmatpush1.msra.mxu0 0.0
          %290 = vmatprep.subr.mxu0 0.0
          %291 = vmatpush1.msra.mxu0 0.0
          %292 = vmatprep.subr.mxu0 0.0
          %293 = vmatpush1.msra.mxu0 0.0
          %294 = vmatprep.subr.mxu0 0.0
          %295 = vmatpush1.msra.mxu0 0.0
          %296 = vmatprep.subr.mxu0 0.0
          %297 = vmatpush1.msra.mxu0 0.0
          %298 = vmatprep.subr.mxu0 0.0
          %299 = vmatpush1.msra.mxu0 0.0
          %300 = vmatprep.subr.mxu0 0.0
          %301 = vmatpush1.msra.mxu0 0.0
          %302 = vmatprep.subr.mxu0 0.0
          %303 = vmatpush1.msra.mxu0 0.0
          %304 = vmatprep.subr.mxu0 0.0
          %305 = vmatpush1.msra.mxu0 0.0
          %306 = vmatprep.subr.mxu0 0.0
          %307 = vmatpush1.msra.mxu0 0.0
          %308 = vmatprep.subr.mxu0 0.0
          %309 = vmatpush1.msra.mxu0 0.0
          %310 = vmatprep.subr.mxu0 0.0
          %311 = vmatpush1.msra.mxu0 0.0
          %312 = vmatprep.subr.mxu0 0.0
          %313 = vmatpush1.msra.mxu0 0.0
          %314 = vmatprep.subr.mxu0 0.0
          %315 = vmatpush1.msra.mxu0 0.0
          %316 = vmatprep.subr.mxu0 0.0
          %317 = vmatpush1.msra.mxu0 0.0
          %318 = vmatprep.subr.mxu0 0.0
          %319 = vmatpush1.msra.mxu0 0.0
          %320 = vmatprep.subr.mxu0 0.0
          %321 = vmatpush1.msra.mxu0 0.0
          %322 = vmatprep.subr.mxu0 0.0
          %323 = vmatpush1.msra.mxu0 0.0
          %324 = vmatprep.subr.mxu0 0.0
          %325 = vmatpush1.msra.mxu0 0.0
          %326 = vmatprep.mubr.f32.mxu0 0.0
          %327 = vmatmul.mubr.f32.gmra.mrb[0].mxu0 %v260
          %v328 = vpop.f32.mrb[0].mxu0
          %v329 = vadd.f32 0.0, %v328
          %v330 = vpop.f32.mrb[0].mxu0
          %331 = vdwg.mxu0
          %333 = vset.pattern.permute.xlu0 0
          %334 = vperm.xlu0 %333, %v253
          %v335 = vpop.permute.xlu0 %334
          %v337 = vmul.f32 %v335, %v329
          %v338 = vadd.f32 %v337, 0.0
          %s339 = scalar_lea.vmem %s2, 32
          %v340 = vld [vmem:[%s339] sm:$0xff]
          %v341 = vld [vmem:[%s339 + $0x8] sm:$0xff]
          %v342 = vld [vmem:[%s339 + $0x10] sm:$0xff]
          %v343 = vld [vmem:[%s339 + $0x18] sm:$0xff]
          %344 = vmatprep.subr.mxu0 0.0
          %345 = vmatpush1.msra.mxu0 %v340
          %346 = vmatprep.subr.mxu0 0.0
          %347 = vmatpush1.msra.mxu0 %v341
          %348 = vmatprep.subr.mxu0 0.0
          %349 = vmatpush1.msra.mxu0 %v342
          %350 = vmatprep.subr.mxu0 0.0
          %351 = vmatpush1.msra.mxu0 %v343
          %352 = vmatprep.subr.mxu0 0.0
          %353 = vmatpush1.msra.mxu0 0.0
          %354 = vmatprep.subr.mxu0 0.0
          %355 = vmatpush1.msra.mxu0 0.0
          %356 = vmatprep.subr.mxu0 0.0
          %357 = vmatpush1.msra.mxu0 0.0
          %358 = vmatprep.subr.mxu0 0.0
          %359 = vmatpush1.msra.mxu0 0.0
          %360 = vmatprep.subr.mxu0 0.0
          %361 = vmatpush1.msra.mxu0 0.0
          %362 = vmatprep.subr.mxu0 0.0
          %363 = vmatpush1.msra.mxu0 0.0
          %364 = vmatprep.subr.mxu0 0.0
          %365 = vmatpush1.msra.mxu0 0.0
          %366 = vmatprep.subr.mxu0 0.0
          %367 = vmatpush1.msra.mxu0 0.0
          %368 = vmatprep.subr.mxu0 0.0
          %369 = vmatpush1.msra.mxu0 0.0
          %370 = vmatprep.subr.mxu0 0.0
          %371 = vmatpush1.msra.mxu0 0.0
          %372 = vmatprep.subr.mxu0 0.0
          %373 = vmatpush1.msra.mxu0 0.0
          %374 = vmatprep.subr.mxu0 0.0
          %375 = vmatpush1.msra.mxu0 0.0
          %376 = vmatprep.subr.mxu0 0.0
          %377 = vmatpush1.msra.mxu0 0.0
          %378 = vmatprep.subr.mxu0 0.0
          %379 = vmatpush1.msra.mxu0 0.0
          %380 = vmatprep.subr.mxu0 0.0
          %381 = vmatpush1.msra.mxu0 0.0
          %382 = vmatprep.subr.mxu0 0.0
          %383 = vmatpush1.msra.mxu0 0.0
          %384 = vmatprep.subr.mxu0 0.0
          %385 = vmatpush1.msra.mxu0 0.0
          %386 = vmatprep.subr.mxu0 0.0
          %387 = vmatpush1.msra.mxu0 0.0
          %388 = vmatprep.subr.mxu0 0.0
          %389 = vmatpush1.msra.mxu0 0.0
          %390 = vmatprep.subr.mxu0 0.0
          %391 = vmatpush1.msra.mxu0 0.0
          %392 = vmatprep.subr.mxu0 0.0
          %393 = vmatpush1.msra.mxu0 0.0
          %394 = vmatprep.subr.mxu0 0.0
          %395 = vmatpush1.msra.mxu0 0.0
          %396 = vmatprep.subr.mxu0 0.0
          %397 = vmatpush1.msra.mxu0 0.0
          %398 = vmatprep.subr.mxu0 0.0
          %399 = vmatpush1.msra.mxu0 0.0
          %400 = vmatprep.subr.mxu0 0.0
          %401 = vmatpush1.msra.mxu0 0.0
          %402 = vmatprep.subr.mxu0 0.0
          %403 = vmatpush1.msra.mxu0 0.0
          %404 = vmatprep.subr.mxu0 0.0
          %405 = vmatpush1.msra.mxu0 0.0
          %406 = vmatprep.subr.mxu0 0.0
          %407 = vmatpush1.msra.mxu0 0.0
          %408 = vmatprep.mubr.f32.mxu0 0.0
          %409 = vmatmul.mubr.f32.gmra.mrb[0].mxu0 %v260
          %v410 = vpop.f32.mrb[0].mxu0
          %v411 = vadd.f32 0.0, %v410
          %v412 = vpop.f32.mrb[0].mxu0
          %413 = vdwg.mxu0
          %414 = vset.pattern.permute.xlu0 1
          %415 = vperm.xlu0 %414, %v253
          %v416 = vpop.permute.xlu0 %415
          %v418 = vmul.f32 %v416, %v411
          %v419 = vadd.f32 %v338, %v418
          %s420 = scalar_lea.vmem %s2, 64
          %v421 = vld [vmem:[%s420] sm:$0xff]
          %v422 = vld [vmem:[%s420 + $0x8] sm:$0xff]
          %v423 = vld [vmem:[%s420 + $0x10] sm:$0xff]
          %v424 = vld [vmem:[%s420 + $0x18] sm:$0xff]
          %425 = vmatprep.subr.mxu0 0.0
          %426 = vmatpush1.msra.mxu0 %v421
          %427 = vmatprep.subr.mxu0 0.0
          %428 = vmatpush1.msra.mxu0 %v422
          %429 = vmatprep.subr.mxu0 0.0
          %430 = vmatpush1.msra.mxu0 %v423
          %431 = vmatprep.subr.mxu0 0.0
          %432 = vmatpush1.msra.mxu0 %v424
          %433 = vmatprep.subr.mxu0 0.0
          %434 = vmatpush1.msra.mxu0 0.0
          %435 = vmatprep.subr.mxu0 0.0
          %436 = vmatpush1.msra.mxu0 0.0
          %437 = vmatprep.subr.mxu0 0.0
          %438 = vmatpush1.msra.mxu0 0.0
          %439 = vmatprep.subr.mxu0 0.0
          %440 = vmatpush1.msra.mxu0 0.0
          %441 = vmatprep.subr.mxu0 0.0
          %442 = vmatpush1.msra.mxu0 0.0
          %443 = vmatprep.subr.mxu0 0.0
          %444 = vmatpush1.msra.mxu0 0.0
          %445 = vmatprep.subr.mxu0 0.0
          %446 = vmatpush1.msra.mxu0 0.0
          %447 = vmatprep.subr.mxu0 0.0
          %448 = vmatpush1.msra.mxu0 0.0
          %449 = vmatprep.subr.mxu0 0.0
          %450 = vmatpush1.msra.mxu0 0.0
          %451 = vmatprep.subr.mxu0 0.0
          %452 = vmatpush1.msra.mxu0 0.0
          %453 = vmatprep.subr.mxu0 0.0
          %454 = vmatpush1.msra.mxu0 0.0
          %455 = vmatprep.subr.mxu0 0.0
          %456 = vmatpush1.msra.mxu0 0.0
          %457 = vmatprep.subr.mxu0 0.0
          %458 = vmatpush1.msra.mxu0 0.0
          %459 = vmatprep.subr.mxu0 0.0
          %460 = vmatpush1.msra.mxu0 0.0
          %461 = vmatprep.subr.mxu0 0.0
          %462 = vmatpush1.msra.mxu0 0.0
          %463 = vmatprep.subr.mxu0 0.0
          %464 = vmatpush1.msra.mxu0 0.0
          %465 = vmatprep.subr.mxu0 0.0
          %466 = vmatpush1.msra.mxu0 0.0
          %467 = vmatprep.subr.mxu0 0.0
          %468 = vmatpush1.msra.mxu0 0.0
          %469 = vmatprep.subr.mxu0 0.0
          %470 = vmatpush1.msra.mxu0 0.0
          %471 = vmatprep.subr.mxu0 0.0
          %472 = vmatpush1.msra.mxu0 0.0
          %473 = vmatprep.subr.mxu0 0.0
          %474 = vmatpush1.msra.mxu0 0.0
          %475 = vmatprep.subr.mxu0 0.0
          %476 = vmatpush1.msra.mxu0 0.0
          %477 = vmatprep.subr.mxu0 0.0
          %478 = vmatpush1.msra.mxu0 0.0
          %479 = vmatprep.subr.mxu0 0.0
          %480 = vmatpush1.msra.mxu0 0.0
          %481 = vmatprep.subr.mxu0 0.0
          %482 = vmatpush1.msra.mxu0 0.0
          %483 = vmatprep.subr.mxu0 0.0
          %484 = vmatpush1.msra.mxu0 0.0
          %485 = vmatprep.subr.mxu0 0.0
          %486 = vmatpush1.msra.mxu0 0.0
          %487 = vmatprep.subr.mxu0 0.0
          %488 = vmatpush1.msra.mxu0 0.0
          %489 = vmatprep.mubr.f32.mxu0 0.0
          %490 = vmatmul.mubr.f32.gmra.mrb[0].mxu0 %v260
          %v491 = vpop.f32.mrb[0].mxu0
          %v492 = vadd.f32 0.0, %v491
          %v493 = vpop.f32.mrb[0].mxu0
          %494 = vdwg.mxu0
          %495 = vset.pattern.permute.xlu0 2
          %496 = vperm.xlu0 %495, %v253
          %v497 = vpop.permute.xlu0 %496
          %v499 = vmul.f32 %v497, %v492
          %v500 = vadd.f32 %v419, %v499
          %s501 = scalar_lea.vmem %s2, 96
          %v502 = vld [vmem:[%s501] sm:$0xff]
          %v503 = vld [vmem:[%s501 + $0x8] sm:$0xff]
          %v504 = vld [vmem:[%s501 + $0x10] sm:$0xff]
          %v505 = vld [vmem:[%s501 + $0x18] sm:$0xff]
          %506 = vmatprep.subr.mxu0 0.0
          %507 = vmatpush1.msra.mxu0 %v502
          %508 = vmatprep.subr.mxu0 0.0
          %509 = vmatpush1.msra.mxu0 %v503
          %510 = vmatprep.subr.mxu0 0.0
          %511 = vmatpush1.msra.mxu0 %v504
          %512 = vmatprep.subr.mxu0 0.0
          %513 = vmatpush1.msra.mxu0 %v505
          %514 = vmatprep.subr.mxu0 0.0
          %515 = vmatpush1.msra.mxu0 0.0
          %516 = vmatprep.subr.mxu0 0.0
          %517 = vmatpush1.msra.mxu0 0.0
          %518 = vmatprep.subr.mxu0 0.0
          %519 = vmatpush1.msra.mxu0 0.0
          %520 = vmatprep.subr.mxu0 0.0
          %521 = vmatpush1.msra.mxu0 0.0
          %522 = vmatprep.subr.mxu0 0.0
          %523 = vmatpush1.msra.mxu0 0.0
          %524 = vmatprep.subr.mxu0 0.0
          %525 = vmatpush1.msra.mxu0 0.0
          %526 = vmatprep.subr.mxu0 0.0
          %527 = vmatpush1.msra.mxu0 0.0
          %528 = vmatprep.subr.mxu0 0.0
          %529 = vmatpush1.msra.mxu0 0.0
          %530 = vmatprep.subr.mxu0 0.0
          %531 = vmatpush1.msra.mxu0 0.0
          %532 = vmatprep.subr.mxu0 0.0
          %533 = vmatpush1.msra.mxu0 0.0
          %534 = vmatprep.subr.mxu0 0.0
          %535 = vmatpush1.msra.mxu0 0.0
          %536 = vmatprep.subr.mxu0 0.0
          %537 = vmatpush1.msra.mxu0 0.0
          %538 = vmatprep.subr.mxu0 0.0
          %539 = vmatpush1.msra.mxu0 0.0
          %540 = vmatprep.subr.mxu0 0.0
          %541 = vmatpush1.msra.mxu0 0.0
          %542 = vmatprep.subr.mxu0 0.0
          %543 = vmatpush1.msra.mxu0 0.0
          %544 = vmatprep.subr.mxu0 0.0
          %545 = vmatpush1.msra.mxu0 0.0
          %546 = vmatprep.subr.mxu0 0.0
          %547 = vmatpush1.msra.mxu0 0.0
          %548 = vmatprep.subr.mxu0 0.0
          %549 = vmatpush1.msra.mxu0 0.0
          %550 = vmatprep.subr.mxu0 0.0
          %551 = vmatpush1.msra.mxu0 0.0
          %552 = vmatprep.subr.mxu0 0.0
          %553 = vmatpush1.msra.mxu0 0.0
          %554 = vmatprep.subr.mxu0 0.0
          %555 = vmatpush1.msra.mxu0 0.0
          %556 = vmatprep.subr.mxu0 0.0
          %557 = vmatpush1.msra.mxu0 0.0
          %558 = vmatprep.subr.mxu0 0.0
          %559 = vmatpush1.msra.mxu0 0.0
          %560 = vmatprep.subr.mxu0 0.0
          %561 = vmatpush1.msra.mxu0 0.0
          %562 = vmatprep.subr.mxu0 0.0
          %563 = vmatpush1.msra.mxu0 0.0
          %564 = vmatprep.subr.mxu0 0.0
          %565 = vmatpush1.msra.mxu0 0.0
          %566 = vmatprep.subr.mxu0 0.0
          %567 = vmatpush1.msra.mxu0 0.0
          %568 = vmatprep.subr.mxu0 0.0
          %569 = vmatpush1.msra.mxu0 0.0
          %570 = vmatprep.mubr.f32.mxu0 0.0
          %571 = vmatmul.mubr.f32.gmra.mrb[0].mxu0 %v260
          %v572 = vpop.f32.mrb[0].mxu0
          %v573 = vadd.f32 0.0, %v572
          %v574 = vpop.f32.mrb[0].mxu0
          %575 = vdwg.mxu0
          %576 = vset.pattern.permute.xlu0 3
          %577 = vperm.xlu0 %576, %v253
          %v578 = vpop.permute.xlu0 %577
          %v580 = vmul.f32 %v578, %v573
          %v581 = vadd.f32 %v500, %v580
          %s582 = scalar_lea.vmem %s2, 128
          %v583 = vld [vmem:[%s582] sm:$0xff]
          %v584 = vld [vmem:[%s582 + $0x8] sm:$0xff]
          %v585 = vld [vmem:[%s582 + $0x10] sm:$0xff]
          %v586 = vld [vmem:[%s582 + $0x18] sm:$0xff]
          %587 = vmatprep.subr.mxu0 0.0
          %588 = vmatpush1.msra.mxu0 %v583
          %589 = vmatprep.subr.mxu0 0.0
          %590 = vmatpush1.msra.mxu0 %v584
          %591 = vmatprep.subr.mxu0 0.0
          %592 = vmatpush1.msra.mxu0 %v585
          %593 = vmatprep.subr.mxu0 0.0
          %594 = vmatpush1.msra.mxu0 %v586
          %595 = vmatprep.subr.mxu0 0.0
          %596 = vmatpush1.msra.mxu0 0.0
          %597 = vmatprep.subr.mxu0 0.0
          %598 = vmatpush1.msra.mxu0 0.0
          %599 = vmatprep.subr.mxu0 0.0
          %600 = vmatpush1.msra.mxu0 0.0
          %601 = vmatprep.subr.mxu0 0.0
          %602 = vmatpush1.msra.mxu0 0.0
          %603 = vmatprep.subr.mxu0 0.0
          %604 = vmatpush1.msra.mxu0 0.0
          %605 = vmatprep.subr.mxu0 0.0
          %606 = vmatpush1.msra.mxu0 0.0
          %607 = vmatprep.subr.mxu0 0.0
          %608 = vmatpush1.msra.mxu0 0.0
          %609 = vmatprep.subr.mxu0 0.0
          %610 = vmatpush1.msra.mxu0 0.0
          %611 = vmatprep.subr.mxu0 0.0
          %612 = vmatpush1.msra.mxu0 0.0
          %613 = vmatprep.subr.mxu0 0.0
          %614 = vmatpush1.msra.mxu0 0.0
          %615 = vmatprep.subr.mxu0 0.0
          %616 = vmatpush1.msra.mxu0 0.0
          %617 = vmatprep.subr.mxu0 0.0
          %618 = vmatpush1.msra.mxu0 0.0
          %619 = vmatprep.subr.mxu0 0.0
          %620 = vmatpush1.msra.mxu0 0.0
          %621 = vmatprep.subr.mxu0 0.0
          %622 = vmatpush1.msra.mxu0 0.0
          %623 = vmatprep.subr.mxu0 0.0
          %624 = vmatpush1.msra.mxu0 0.0
          %625 = vmatprep.subr.mxu0 0.0
          %626 = vmatpush1.msra.mxu0 0.0
          %627 = vmatprep.subr.mxu0 0.0
          %628 = vmatpush1.msra.mxu0 0.0
          %629 = vmatprep.subr.mxu0 0.0
          %630 = vmatpush1.msra.mxu0 0.0
          %631 = vmatprep.subr.mxu0 0.0
          %632 = vmatpush1.msra.mxu0 0.0
          %633 = vmatprep.subr.mxu0 0.0
          %634 = vmatpush1.msra.mxu0 0.0
          %635 = vmatprep.subr.mxu0 0.0
          %636 = vmatpush1.msra.mxu0 0.0
          %637 = vmatprep.subr.mxu0 0.0
          %638 = vmatpush1.msra.mxu0 0.0
          %639 = vmatprep.subr.mxu0 0.0
          %640 = vmatpush1.msra.mxu0 0.0
          %641 = vmatprep.subr.mxu0 0.0
          %642 = vmatpush1.msra.mxu0 0.0
          %643 = vmatprep.subr.mxu0 0.0
          %644 = vmatpush1.msra.mxu0 0.0
          %645 = vmatprep.subr.mxu0 0.0
          %646 = vmatpush1.msra.mxu0 0.0
          %647 = vmatprep.subr.mxu0 0.0
          %648 = vmatpush1.msra.mxu0 0.0
          %649 = vmatprep.subr.mxu0 0.0
          %650 = vmatpush1.msra.mxu0 0.0
          %651 = vmatprep.mubr.f32.mxu0 0.0
          %652 = vmatmul.mubr.f32.gmra.mrb[0].mxu0 %v260
          %v653 = vpop.f32.mrb[0].mxu0
          %v654 = vadd.f32 0.0, %v653
          %v655 = vpop.f32.mrb[0].mxu0
          %656 = vdwg.mxu0
          %657 = vset.pattern.permute.xlu0 4
          %658 = vperm.xlu0 %657, %v253
          %v659 = vpop.permute.xlu0 %658
          %v661 = vmul.f32 %v659, %v654
          %v662 = vadd.f32 %v581, %v661
          %s663 = scalar_lea.vmem %s2, 160
          %v664 = vld [vmem:[%s663] sm:$0xff]
          %v665 = vld [vmem:[%s663 + $0x8] sm:$0xff]
          %v666 = vld [vmem:[%s663 + $0x10] sm:$0xff]
          %v667 = vld [vmem:[%s663 + $0x18] sm:$0xff]
          %668 = vmatprep.subr.mxu0 0.0
          %669 = vmatpush1.msra.mxu0 %v664
          %670 = vmatprep.subr.mxu0 0.0
          %671 = vmatpush1.msra.mxu0 %v665
          %672 = vmatprep.subr.mxu0 0.0
          %673 = vmatpush1.msra.mxu0 %v666
          %674 = vmatprep.subr.mxu0 0.0
          %675 = vmatpush1.msra.mxu0 %v667
          %676 = vmatprep.subr.mxu0 0.0
          %677 = vmatpush1.msra.mxu0 0.0
          %678 = vmatprep.subr.mxu0 0.0
          %679 = vmatpush1.msra.mxu0 0.0
          %680 = vmatprep.subr.mxu0 0.0
          %681 = vmatpush1.msra.mxu0 0.0
          %682 = vmatprep.subr.mxu0 0.0
          %683 = vmatpush1.msra.mxu0 0.0
          %684 = vmatprep.subr.mxu0 0.0
          %685 = vmatpush1.msra.mxu0 0.0
          %686 = vmatprep.subr.mxu0 0.0
          %687 = vmatpush1.msra.mxu0 0.0
          %688 = vmatprep.subr.mxu0 0.0
          %689 = vmatpush1.msra.mxu0 0.0
          %690 = vmatprep.subr.mxu0 0.0
          %691 = vmatpush1.msra.mxu0 0.0
          %692 = vmatprep.subr.mxu0 0.0
          %693 = vmatpush1.msra.mxu0 0.0
          %694 = vmatprep.subr.mxu0 0.0
          %695 = vmatpush1.msra.mxu0 0.0
          %696 = vmatprep.subr.mxu0 0.0
          %697 = vmatpush1.msra.mxu0 0.0
          %698 = vmatprep.subr.mxu0 0.0
          %699 = vmatpush1.msra.mxu0 0.0
          %700 = vmatprep.subr.mxu0 0.0
          %701 = vmatpush1.msra.mxu0 0.0
          %702 = vmatprep.subr.mxu0 0.0
          %703 = vmatpush1.msra.mxu0 0.0
          %704 = vmatprep.subr.mxu0 0.0
          %705 = vmatpush1.msra.mxu0 0.0
          %706 = vmatprep.subr.mxu0 0.0
          %707 = vmatpush1.msra.mxu0 0.0
          %708 = vmatprep.subr.mxu0 0.0
          %709 = vmatpush1.msra.mxu0 0.0
          %710 = vmatprep.subr.mxu0 0.0
          %711 = vmatpush1.msra.mxu0 0.0
          %712 = vmatprep.subr.mxu0 0.0
          %713 = vmatpush1.msra.mxu0 0.0
          %714 = vmatprep.subr.mxu0 0.0
          %715 = vmatpush1.msra.mxu0 0.0
          %716 = vmatprep.subr.mxu0 0.0
          %717 = vmatpush1.msra.mxu0 0.0
          %718 = vmatprep.subr.mxu0 0.0
          %719 = vmatpush1.msra.mxu0 0.0
          %720 = vmatprep.subr.mxu0 0.0
          %721 = vmatpush1.msra.mxu0 0.0
          %722 = vmatprep.subr.mxu0 0.0
          %723 = vmatpush1.msra.mxu0 0.0
          %724 = vmatprep.subr.mxu0 0.0
          %725 = vmatpush1.msra.mxu0 0.0
          %726 = vmatprep.subr.mxu0 0.0
          %727 = vmatpush1.msra.mxu0 0.0
          %728 = vmatprep.subr.mxu0 0.0
          %729 = vmatpush1.msra.mxu0 0.0
          %730 = vmatprep.subr.mxu0 0.0
          %731 = vmatpush1.msra.mxu0 0.0
          %732 = vmatprep.mubr.f32.mxu0 0.0
          %733 = vmatmul.mubr.f32.gmra.mrb[0].mxu0 %v260
          %v734 = vpop.f32.mrb[0].mxu0
          %v735 = vadd.f32 0.0, %v734
          %v736 = vpop.f32.mrb[0].mxu0
          %737 = vdwg.mxu0
          %738 = vset.pattern.permute.xlu0 5
          %739 = vperm.xlu0 %738, %v253
          %v740 = vpop.permute.xlu0 %739
          %v742 = vmul.f32 %v740, %v735
          %v743 = vadd.f32 %v662, %v742
          %s744 = scalar_lea.vmem %s2, 192
          %v745 = vld [vmem:[%s744] sm:$0xff]
          %v746 = vld [vmem:[%s744 + $0x8] sm:$0xff]
          %v747 = vld [vmem:[%s744 + $0x10] sm:$0xff]
          %v748 = vld [vmem:[%s744 + $0x18] sm:$0xff]
          %749 = vmatprep.subr.mxu0 0.0
          %750 = vmatpush1.msra.mxu0 %v745
          %751 = vmatprep.subr.mxu0 0.0
          %752 = vmatpush1.msra.mxu0 %v746
          %753 = vmatprep.subr.mxu0 0.0
          %754 = vmatpush1.msra.mxu0 %v747
          %755 = vmatprep.subr.mxu0 0.0
          %756 = vmatpush1.msra.mxu0 %v748
          %757 = vmatprep.subr.mxu0 0.0
          %758 = vmatpush1.msra.mxu0 0.0
          %759 = vmatprep.subr.mxu0 0.0
          %760 = vmatpush1.msra.mxu0 0.0
          %761 = vmatprep.subr.mxu0 0.0
          %762 = vmatpush1.msra.mxu0 0.0
          %763 = vmatprep.subr.mxu0 0.0
          %764 = vmatpush1.msra.mxu0 0.0
          %765 = vmatprep.subr.mxu0 0.0
          %766 = vmatpush1.msra.mxu0 0.0
          %767 = vmatprep.subr.mxu0 0.0
          %768 = vmatpush1.msra.mxu0 0.0
          %769 = vmatprep.subr.mxu0 0.0
          %770 = vmatpush1.msra.mxu0 0.0
          %771 = vmatprep.subr.mxu0 0.0
          %772 = vmatpush1.msra.mxu0 0.0
          %773 = vmatprep.subr.mxu0 0.0
          %774 = vmatpush1.msra.mxu0 0.0
          %775 = vmatprep.subr.mxu0 0.0
          %776 = vmatpush1.msra.mxu0 0.0
          %777 = vmatprep.subr.mxu0 0.0
          %778 = vmatpush1.msra.mxu0 0.0
          %779 = vmatprep.subr.mxu0 0.0
          %780 = vmatpush1.msra.mxu0 0.0
          %781 = vmatprep.subr.mxu0 0.0
          %782 = vmatpush1.msra.mxu0 0.0
          %783 = vmatprep.subr.mxu0 0.0
          %784 = vmatpush1.msra.mxu0 0.0
          %785 = vmatprep.subr.mxu0 0.0
          %786 = vmatpush1.msra.mxu0 0.0
          %787 = vmatprep.subr.mxu0 0.0
          %788 = vmatpush1.msra.mxu0 0.0
          %789 = vmatprep.subr.mxu0 0.0
          %790 = vmatpush1.msra.mxu0 0.0
          %791 = vmatprep.subr.mxu0 0.0
          %792 = vmatpush1.msra.mxu0 0.0
          %793 = vmatprep.subr.mxu0 0.0
          %794 = vmatpush1.msra.mxu0 0.0
          %795 = vmatprep.subr.mxu0 0.0
          %796 = vmatpush1.msra.mxu0 0.0
          %797 = vmatprep.subr.mxu0 0.0
          %798 = vmatpush1.msra.mxu0 0.0
          %799 = vmatprep.subr.mxu0 0.0
          %800 = vmatpush1.msra.mxu0 0.0
          %801 = vmatprep.subr.mxu0 0.0
          %802 = vmatpush1.msra.mxu0 0.0
          %803 = vmatprep.subr.mxu0 0.0
          %804 = vmatpush1.msra.mxu0 0.0
          %805 = vmatprep.subr.mxu0 0.0
          %806 = vmatpush1.msra.mxu0 0.0
          %807 = vmatprep.subr.mxu0 0.0
          %808 = vmatpush1.msra.mxu0 0.0
          %809 = vmatprep.subr.mxu0 0.0
          %810 = vmatpush1.msra.mxu0 0.0
          %811 = vmatprep.subr.mxu0 0.0
          %812 = vmatpush1.msra.mxu0 0.0
          %813 = vmatprep.mubr.f32.mxu0 0.0
          %814 = vmatmul.mubr.f32.gmra.mrb[0].mxu0 %v260
          %v815 = vpop.f32.mrb[0].mxu0
          %v816 = vadd.f32 0.0, %v815
          %v817 = vpop.f32.mrb[0].mxu0
          %818 = vdwg.mxu0
          %819 = vset.pattern.permute.xlu0 6
          %820 = vperm.xlu0 %819, %v253
          %v821 = vpop.permute.xlu0 %820
          %v823 = vmul.f32 %v821, %v816
          %v824 = vadd.f32 %v743, %v823
          %s825 = scalar_lea.vmem %s2, 224
          %v826 = vld [vmem:[%s825] sm:$0xff]
          %v827 = vld [vmem:[%s825 + $0x8] sm:$0xff]
          %v828 = vld [vmem:[%s825 + $0x10] sm:$0xff]
          %v829 = vld [vmem:[%s825 + $0x18] sm:$0xff]
          %830 = vmatprep.subr.mxu0 0.0
          %831 = vmatpush1.msra.mxu0 %v826
          %832 = vmatprep.subr.mxu0 0.0
          %833 = vmatpush1.msra.mxu0 %v827
          %834 = vmatprep.subr.mxu0 0.0
          %835 = vmatpush1.msra.mxu0 %v828
          %836 = vmatprep.subr.mxu0 0.0
          %837 = vmatpush1.msra.mxu0 %v829
          %838 = vmatprep.subr.mxu0 0.0
          %839 = vmatpush1.msra.mxu0 0.0
          %840 = vmatprep.subr.mxu0 0.0
          %841 = vmatpush1.msra.mxu0 0.0
          %842 = vmatprep.subr.mxu0 0.0
          %843 = vmatpush1.msra.mxu0 0.0
          %844 = vmatprep.subr.mxu0 0.0
          %845 = vmatpush1.msra.mxu0 0.0
          %846 = vmatprep.subr.mxu0 0.0
          %847 = vmatpush1.msra.mxu0 0.0
          %848 = vmatprep.subr.mxu0 0.0
          %849 = vmatpush1.msra.mxu0 0.0
          %850 = vmatprep.subr.mxu0 0.0
          %851 = vmatpush1.msra.mxu0 0.0
          %852 = vmatprep.subr.mxu0 0.0
          %853 = vmatpush1.msra.mxu0 0.0
          %854 = vmatprep.subr.mxu0 0.0
          %855 = vmatpush1.msra.mxu0 0.0
          %856 = vmatprep.subr.mxu0 0.0
          %857 = vmatpush1.msra.mxu0 0.0
          %858 = vmatprep.subr.mxu0 0.0
          %859 = vmatpush1.msra.mxu0 0.0
          %860 = vmatprep.subr.mxu0 0.0
          %861 = vmatpush1.msra.mxu0 0.0
          %862 = vmatprep.subr.mxu0 0.0
          %863 = vmatpush1.msra.mxu0 0.0
          %864 = vmatprep.subr.mxu0 0.0
          %865 = vmatpush1.msra.mxu0 0.0
          %866 = vmatprep.subr.mxu0 0.0
          %867 = vmatpush1.msra.mxu0 0.0
          %868 = vmatprep.subr.mxu0 0.0
          %869 = vmatpush1.msra.mxu0 0.0
          %870 = vmatprep.subr.mxu0 0.0
          %871 = vmatpush1.msra.mxu0 0.0
          %872 = vmatprep.subr.mxu0 0.0
          %873 = vmatpush1.msra.mxu0 0.0
          %874 = vmatprep.subr.mxu0 0.0
          %875 = vmatpush1.msra.mxu0 0.0
          %876 = vmatprep.subr.mxu0 0.0
          %877 = vmatpush1.msra.mxu0 0.0
          %878 = vmatprep.subr.mxu0 0.0
          %879 = vmatpush1.msra.mxu0 0.0
          %880 = vmatprep.subr.mxu0 0.0
          %881 = vmatpush1.msra.mxu0 0.0
          %882 = vmatprep.subr.mxu0 0.0
          %883 = vmatpush1.msra.mxu0 0.0
          %884 = vmatprep.subr.mxu0 0.0
          %885 = vmatpush1.msra.mxu0 0.0
          %886 = vmatprep.subr.mxu0 0.0
          %887 = vmatpush1.msra.mxu0 0.0
          %888 = vmatprep.subr.mxu0 0.0
          %889 = vmatpush1.msra.mxu0 0.0
          %890 = vmatprep.subr.mxu0 0.0
          %891 = vmatpush1.msra.mxu0 0.0
          %892 = vmatprep.subr.mxu0 0.0
          %893 = vmatpush1.msra.mxu0 0.0
          %894 = vmatprep.mubr.f32.mxu0 0.0
          %895 = vmatmul.mubr.f32.gmra.mrb[0].mxu0 %v260
          %v896 = vpop.f32.mrb[0].mxu0
          %v897 = vadd.f32 0.0, %v896
          %v898 = vpop.f32.mrb[0].mxu0
          %899 = vdwg.mxu0
          %900 = vset.pattern.permute.xlu0 7
          %901 = vperm.xlu0 %900, %v253
          %v902 = vpop.permute.xlu0 %901
          %v904 = vmul.f32 %v902, %v897
          %v905 = vadd.f32 %v824, %v904
          %v906 = vpack.c.bf16 %v905, %v905
          %vm907 = vcmask 257024
          %908 = vst.msk [vmem:[#allocation2] sm:$0xf] %vm907, %v906
        $region40: #{tpu_custom_call.1} parent=35 // pred_fallthru
          _
        %v909 = vld [vmem:[#allocation2] sm:$0xf]
        %v910 = vld [vmem:[%s244] sm:$0xf]
        %v911 = vld [vmem:[%s244 + $0x4] sm:$0xf]
        %v912 = vld [vmem:[%s244 + $0x8] sm:$0xf]
        %v913 = vld [vmem:[%s244 + $0xc] sm:$0xf]
        %v914 = vld [vmem:[%s244 + $0x10] sm:$0xf]
        %v915 = vld [vmem:[%s244 + $0x14] sm:$0xf]
        %v916 = vld [vmem:[%s244 + $0x18] sm:$0xf]
        %v917 = vld [vmem:[%s244 + $0x1c] sm:$0xf]
        %v918 = vld [vmem:[%s244 + $0x20] sm:$0xf]
        %v919 = vld [vmem:[%s244 + $0x24] sm:$0xf]
        %v920 = vld [vmem:[%s244 + $0x28] sm:$0xf]
        %v921 = vld [vmem:[%s244 + $0x2c] sm:$0xf]
        %v922 = vld [vmem:[%s244 + $0x30] sm:$0xf]
        %v923 = vld [vmem:[%s244 + $0x34] sm:$0xf]
        %v924 = vld [vmem:[%s244 + $0x38] sm:$0xf]
        %v925 = vld [vmem:[%s244 + $0x3c] sm:$0xf]
        %v926 = vld [vmem:[%s244 + $0x40] sm:$0xf]
        %v927 = vld [vmem:[%s244 + $0x44] sm:$0xf]
        %v928 = vld [vmem:[%s244 + $0x48] sm:$0xf]
        %v929 = vld [vmem:[%s244 + $0x4c] sm:$0xf]
        %v930 = vld [vmem:[%s244 + $0x50] sm:$0xf]
        %v931 = vld [vmem:[%s244 + $0x54] sm:$0xf]
        %v932 = vld [vmem:[%s244 + $0x58] sm:$0xf]
        %v933 = vld [vmem:[%s244 + $0x5c] sm:$0xf]
        %v934 = vld [vmem:[%s244 + $0x60] sm:$0xf]
        %v935 = vld [vmem:[%s244 + $0x64] sm:$0xf]
        %v936 = vld [vmem:[%s244 + $0x68] sm:$0xf]
        %v937 = vld [vmem:[%s244 + $0x6c] sm:$0xf]
        %v938 = vld [vmem:[%s244 + $0x70] sm:$0xf]
        %v939 = vld [vmem:[%s244 + $0x74] sm:$0xf]
        %v940 = vld [vmem:[%s244 + $0x78] sm:$0xf]
        %v941 = vld [vmem:[%s244 + $0x7c] sm:$0xf]
        %v942 = vld [vmem:[%s244 + $0x80] sm:$0xf]
        %v943 = vld [vmem:[%s244 + $0x84] sm:$0xf]
        %v944 = vld [vmem:[%s244 + $0x88] sm:$0xf]
        %v945 = vld [vmem:[%s244 + $0x8c] sm:$0xf]
        %v946 = vld [vmem:[%s244 + $0x90] sm:$0xf]
        %v947 = vld [vmem:[%s244 + $0x94] sm:$0xf]
        %v948 = vld [vmem:[%s244 + $0x98] sm:$0xf]
        %v949 = vld [vmem:[%s244 + $0x9c] sm:$0xf]
        %v950 = vld [vmem:[%s244 + $0xa0] sm:$0xf]
        %v951 = vld [vmem:[%s244 + $0xa4] sm:$0xf]
        %v952 = vld [vmem:[%s244 + $0xa8] sm:$0xf]
        %v953 = vld [vmem:[%s244 + $0xac] sm:$0xf]
        %v954 = vld [vmem:[%s244 + $0xb0] sm:$0xf]
        %v955 = vld [vmem:[%s244 + $0xb4] sm:$0xf]
        %v956 = vld [vmem:[%s244 + $0xb8] sm:$0xf]
        %v957 = vld [vmem:[%s244 + $0xbc] sm:$0xf]
        %v958 = vld [vmem:[%s244 + $0xc0] sm:$0xf]
        %v959 = vld [vmem:[%s244 + $0xc4] sm:$0xf]
        %v960 = vld [vmem:[%s244 + $0xc8] sm:$0xf]
        %v961 = vld [vmem:[%s244 + $0xcc] sm:$0xf]
        %v962 = vld [vmem:[%s244 + $0xd0] sm:$0xf]
        %v963 = vld [vmem:[%s244 + $0xd4] sm:$0xf]
        %v964 = vld [vmem:[%s244 + $0xd8] sm:$0xf]
        %v965 = vld [vmem:[%s244 + $0xdc] sm:$0xf]
        %v966 = vld [vmem:[%s244 + $0xe0] sm:$0xf]
        %v967 = vld [vmem:[%s244 + $0xe4] sm:$0xf]
        %v968 = vld [vmem:[%s244 + $0xe8] sm:$0xf]
        %v969 = vld [vmem:[%s244 + $0xec] sm:$0xf]
        %v970 = vld [vmem:[%s244 + $0xf0] sm:$0xf]
        %v971 = vld [vmem:[%s244 + $0xf4] sm:$0xf]
        %v972 = vld [vmem:[%s244 + $0xf8] sm:$0xf]
        %v973 = vld [vmem:[%s244 + $0xfc] sm:$0xf]
        %v1038 = vunpack.c.l.b16 %v910
        %v1039 = vunpack.c.l.b16 %v911
        %v1040 = vunpack.c.l.b16 %v912
        %v1041 = vunpack.c.l.b16 %v913
        %v1042 = vunpack.c.l.b16 %v914
        %v1043 = vunpack.c.l.b16 %v915
        %v1044 = vunpack.c.l.b16 %v916
        %v1045 = vunpack.c.l.b16 %v917
        %v1046 = vunpack.c.l.b16 %v918
        %v1047 = vunpack.c.l.b16 %v919
        %v1048 = vunpack.c.l.b16 %v920
        %v1049 = vunpack.c.l.b16 %v921
        %v1050 = vunpack.c.l.b16 %v922
        %v1051 = vunpack.c.l.b16 %v923
        %v1052 = vunpack.c.l.b16 %v924
        %v1053 = vunpack.c.l.b16 %v925
        %v1054 = vunpack.c.l.b16 %v926
        %v1055 = vunpack.c.l.b16 %v927
        %v1056 = vunpack.c.l.b16 %v928
        %v1057 = vunpack.c.l.b16 %v929
        %v1058 = vunpack.c.l.b16 %v930
        %v1059 = vunpack.c.l.b16 %v931
        %v1060 = vunpack.c.l.b16 %v932
        %v1061 = vunpack.c.l.b16 %v933
        %v1062 = vunpack.c.l.b16 %v934
        %v1063 = vunpack.c.l.b16 %v935
        %v1064 = vunpack.c.l.b16 %v936
        %v1065 = vunpack.c.l.b16 %v937
        %v1066 = vunpack.c.l.b16 %v938
        %v1067 = vunpack.c.l.b16 %v939
        %v1068 = vunpack.c.l.b16 %v940
        %v1069 = vunpack.c.l.b16 %v941
        %v1070 = vunpack.c.l.b16 %v942
        %v1071 = vunpack.c.l.b16 %v943
        %v1072 = vunpack.c.l.b16 %v944
        %v1073 = vunpack.c.l.b16 %v945
        %v1074 = vunpack.c.l.b16 %v946
        %v1075 = vunpack.c.l.b16 %v947
        %v1076 = vunpack.c.l.b16 %v948
        %v1077 = vunpack.c.l.b16 %v949
        %v1078 = vunpack.c.l.b16 %v950
        %v1079 = vunpack.c.l.b16 %v951
        %v1080 = vunpack.c.l.b16 %v952
        %v1081 = vunpack.c.l.b16 %v953
        %v1082 = vunpack.c.l.b16 %v954
        %v1083 = vunpack.c.l.b16 %v955
        %v1084 = vunpack.c.l.b16 %v956
        %v1085 = vunpack.c.l.b16 %v957
        %v1086 = vunpack.c.l.b16 %v958
        %v1087 = vunpack.c.l.b16 %v959
        %v1088 = vunpack.c.l.b16 %v960
        %v1089 = vunpack.c.l.b16 %v961
        %v1090 = vunpack.c.l.b16 %v962
        %v1091 = vunpack.c.l.b16 %v963
        %v1092 = vunpack.c.l.b16 %v964
        %v1093 = vunpack.c.l.b16 %v965
        %v1094 = vunpack.c.l.b16 %v966
        %v1095 = vunpack.c.l.b16 %v967
        %v1096 = vunpack.c.l.b16 %v968
        %v1097 = vunpack.c.l.b16 %v969
        %v1098 = vunpack.c.l.b16 %v970
        %v1099 = vunpack.c.l.b16 %v971
        %v1100 = vunpack.c.l.b16 %v972
        %v1101 = vunpack.c.l.b16 %v973
        %v1102 = vpack.c.b16 %v1039, %v1038
        %v1103 = vpack.c.b16 %v1041, %v1040
        %v1104 = vpack.c.b16 %v1043, %v1042
        %v1105 = vpack.c.b16 %v1045, %v1044
        %v1106 = vpack.c.b16 %v1047, %v1046
        %v1107 = vpack.c.b16 %v1049, %v1048
        %v1108 = vpack.c.b16 %v1051, %v1050
        %v1109 = vpack.c.b16 %v1053, %v1052
        %v1110 = vpack.c.b16 %v1055, %v1054
        %v1111 = vpack.c.b16 %v1057, %v1056
        %v1112 = vpack.c.b16 %v1059, %v1058
        %v1113 = vpack.c.b16 %v1061, %v1060
        %v1114 = vpack.c.b16 %v1063, %v1062
        %v1115 = vpack.c.b16 %v1065, %v1064
        %v1116 = vpack.c.b16 %v1067, %v1066
        %v1117 = vpack.c.b16 %v1069, %v1068
        %v1118 = vpack.c.b16 %v1071, %v1070
        %v1119 = vpack.c.b16 %v1073, %v1072
        %v1120 = vpack.c.b16 %v1075, %v1074
        %v1121 = vpack.c.b16 %v1077, %v1076
        %v1122 = vpack.c.b16 %v1079, %v1078
        %v1123 = vpack.c.b16 %v1081, %v1080
        %v1124 = vpack.c.b16 %v1083, %v1082
        %v1125 = vpack.c.b16 %v1085, %v1084
        %v1126 = vpack.c.b16 %v1087, %v1086
        %v1127 = vpack.c.b16 %v1089, %v1088
        %v1128 = vpack.c.b16 %v1091, %v1090
        %v1129 = vpack.c.b16 %v1093, %v1092
        %v1130 = vpack.c.b16 %v1095, %v1094
        %v1131 = vpack.c.b16 %v1097, %v1096
        %v1132 = vpack.c.b16 %v1099, %v1098
        %v1133 = vpack.c.b16 %v1101, %v1100
        %vm1134 = vcmask 261120
        %v1136 = vsel %vm1134, %v909, 0
        %v1139 = vsel %vm1134, %v1102, 0
        %v1142 = vsel %vm1134, %v1103, 0
        %v1145 = vsel %vm1134, %v1104, 0
        %v1148 = vsel %vm1134, %v1105, 0
        %v1151 = vsel %vm1134, %v1106, 0
        %v1154 = vsel %vm1134, %v1107, 0
        %v1157 = vsel %vm1134, %v1108, 0
        %v1160 = vsel %vm1134, %v1109, 0
        %v1163 = vsel %vm1134, %v1110, 0
        %v1166 = vsel %vm1134, %v1111, 0
        %v1169 = vsel %vm1134, %v1112, 0
        %v1172 = vsel %vm1134, %v1113, 0
        %v1175 = vsel %vm1134, %v1114, 0
        %v1178 = vsel %vm1134, %v1115, 0
        %v1181 = vsel %vm1134, %v1116, 0
        %v1184 = vsel %vm1134, %v1117, 0
        %v1187 = vsel %vm1134, %v1118, 0
        %v1190 = vsel %vm1134, %v1119, 0
        %v1193 = vsel %vm1134, %v1120, 0
        %v1196 = vsel %vm1134, %v1121, 0
        %v1199 = vsel %vm1134, %v1122, 0
        %v1202 = vsel %vm1134, %v1123, 0
        %v1205 = vsel %vm1134, %v1124, 0
        %v1208 = vsel %vm1134, %v1125, 0
        %v1211 = vsel %vm1134, %v1126, 0
        %v1214 = vsel %vm1134, %v1127, 0
        %v1217 = vsel %vm1134, %v1128, 0
        %v1220 = vsel %vm1134, %v1129, 0
        %v1223 = vsel %vm1134, %v1130, 0
        %v1226 = vsel %vm1134, %v1131, 0
        %v1229 = vsel %vm1134, %v1132, 0
        %v1232 = vsel %vm1134, %v1133, 0
        %1234 = vmatprep.subr.bf16.mxu0 0
        %1235 = vmatpush1.bf16.xpose.msra.mxu0 %v1139
        %1236 = vmatprep.subr.bf16.mxu0 0
        %1237 = vmatpush1.bf16.xpose.msra.mxu0 %v1142
        %1238 = vmatprep.subr.bf16.mxu0 0
        %1239 = vmatpush1.bf16.xpose.msra.mxu0 %v1145
        %1240 = vmatprep.subr.bf16.mxu0 0
        %1241 = vmatpush1.bf16.xpose.msra.mxu0 %v1148
        %1242 = vmatprep.subr.bf16.mxu0 0
        %1243 = vmatpush1.bf16.xpose.msra.mxu0 %v1151
        %1244 = vmatprep.subr.bf16.mxu0 0
        %1245 = vmatpush1.bf16.xpose.msra.mxu0 %v1154
        %1246 = vmatprep.subr.bf16.mxu0 0
        %1247 = vmatpush1.bf16.xpose.msra.mxu0 %v1157
        %1248 = vmatprep.subr.bf16.mxu0 0
        %1249 = vmatpush1.bf16.xpose.msra.mxu0 %v1160
        %1250 = vmatprep.subr.bf16.mxu0 0
        %1251 = vmatpush1.bf16.xpose.msra.mxu0 %v1163
        %1252 = vmatprep.subr.bf16.mxu0 0
        %1253 = vmatpush1.bf16.xpose.msra.mxu0 %v1166
        %1254 = vmatprep.subr.bf16.mxu0 0
        %1255 = vmatpush1.bf16.xpose.msra.mxu0 %v1169
        %1256 = vmatprep.subr.bf16.mxu0 0
        %1257 = vmatpush1.bf16.xpose.msra.mxu0 %v1172
        %1258 = vmatprep.subr.bf16.mxu0 0
        %1259 = vmatpush1.bf16.xpose.msra.mxu0 %v1175
        %1260 = vmatprep.subr.bf16.mxu0 0
        %1261 = vmatpush1.bf16.xpose.msra.mxu0 %v1178
        %1262 = vmatprep.subr.bf16.mxu0 0
        %1263 = vmatpush1.bf16.xpose.msra.mxu0 %v1181
        %1264 = vmatprep.subr.bf16.mxu0 0
        %1265 = vmatpush1.bf16.xpose.msra.mxu0 %v1184
        %1266 = vmatprep.mubr.bf16.mxu0 0
        %1267 = vmatmul.mubr.bf16.gmra.mrb[0].mxu0 %v1136
        %v1268 = vpop.f32.mrb[0].mxu0
        %v1269 = vadd.f32 0.0, %v1268
        %v1270 = vpop.f32.mrb[0].mxu0
        %v1271 = vadd.f32 0.0, %v1270
        %v1272 = vpop.f32.mrb[0].mxu0
        %v1273 = vpop.f32.mrb[0].mxu0
        %1274 = vdwg.mxu0
        %1275 = vmatprep.subr.bf16.mxu0 0
        %1276 = vmatpush1.bf16.xpose.msra.mxu0 %v1187
        %1277 = vmatprep.subr.bf16.mxu0 0
        %1278 = vmatpush1.bf16.xpose.msra.mxu0 %v1190
        %1279 = vmatprep.subr.bf16.mxu0 0
        %1280 = vmatpush1.bf16.xpose.msra.mxu0 %v1193
        %1281 = vmatprep.subr.bf16.mxu0 0
        %1282 = vmatpush1.bf16.xpose.msra.mxu0 %v1196
        %1283 = vmatprep.subr.bf16.mxu0 0
        %1284 = vmatpush1.bf16.xpose.msra.mxu0 %v1199
        %1285 = vmatprep.subr.bf16.mxu0 0
        %1286 = vmatpush1.bf16.xpose.msra.mxu0 %v1202
        %1287 = vmatprep.subr.bf16.mxu0 0
        %1288 = vmatpush1.bf16.xpose.msra.mxu0 %v1205
        %1289 = vmatprep.subr.bf16.mxu0 0
        %1290 = vmatpush1.bf16.xpose.msra.mxu0 %v1208
        %1291 = vmatprep.subr.bf16.mxu0 0
        %1292 = vmatpush1.bf16.xpose.msra.mxu0 %v1211
        %1293 = vmatprep.subr.bf16.mxu0 0
        %1294 = vmatpush1.bf16.xpose.msra.mxu0 %v1214
        %1295 = vmatprep.subr.bf16.mxu0 0
        %1296 = vmatpush1.bf16.xpose.msra.mxu0 %v1217
        %1297 = vmatprep.subr.bf16.mxu0 0
        %1298 = vmatpush1.bf16.xpose.msra.mxu0 %v1220
        %1299 = vmatprep.subr.bf16.mxu0 0
        %1300 = vmatpush1.bf16.xpose.msra.mxu0 %v1223
        %1301 = vmatprep.subr.bf16.mxu0 0
        %1302 = vmatpush1.bf16.xpose.msra.mxu0 %v1226
        %1303 = vmatprep.subr.bf16.mxu0 0
        %1304 = vmatpush1.bf16.xpose.msra.mxu0 %v1229
        %1305 = vmatprep.subr.bf16.mxu0 0
        %1306 = vmatpush1.bf16.xpose.msra.mxu0 %v1232
        %1307 = vmatprep.mubr.bf16.mxu0 0
        %1308 = vmatmul.mubr.bf16.gmra.mrb[0].mxu0 %v1136
        %v1309 = vpop.f32.mrb[0].mxu0
        %v1310 = vadd.f32 0.0, %v1309
        %v1311 = vpop.f32.mrb[0].mxu0
        %v1312 = vadd.f32 0.0, %v1311
        %v1313 = vpop.f32.mrb[0].mxu0
        %v1314 = vpop.f32.mrb[0].mxu0
        %1315 = vdwg.mxu0
        %v1316 = vxor.u32 %v1269, 2147483648
        %v1317 = vxor.u32 %v1271, 2147483648
        %v1318 = vxor.u32 %v1310, 2147483648
        %v1319 = vxor.u32 %v1312, 2147483648
        %v1320 = vmul.f32 %v1316, 1.442695
        %v1321 = vpow.pop %v1320
        %v1322 = vmul.f32 %v1317, 1.442695
        %v1323 = vpow.pop %v1322
        %v1324 = vmul.f32 %v1318, 1.442695
        %v1325 = vpow.pop %v1324
        %v1326 = vmul.f32 %v1319, 1.442695
        %v1327 = vpow.pop %v1326
        %v1328 = vadd.f32 %v1321, 1.0
        %v1329 = vadd.f32 %v1323, 1.0
        %v1330 = vadd.f32 %v1325, 1.0
        %v1331 = vadd.f32 %v1327, 1.0
        %v1332 = vrcp.pop %v1328
        %v1333 = vmul.f32 1.0, %v1332
        %v1334 = vrcp.pop %v1329
        %v1335 = vmul.f32 1.0, %v1334
        %v1336 = vrcp.pop %v1330
        %v1337 = vmul.f32 1.0, %v1336
        %v1338 = vrcp.pop %v1331
        %v1339 = vmul.f32 1.0, %v1338
        %1340 = vst [vmem:[%s231] sm:$0xff] %v1333
        %1341 = vst [vmem:[%s231 + $0x8] sm:$0xff] %v1335
        %1342 = vst [vmem:[%s231 + $0x10] sm:$0xff] %v1337
        %1343 = vst [vmem:[%s231 + $0x18] sm:$0xff] %v1339
        %s1344 = sand.u32 %s139, 1
        %s1345 = scalar_lea.sflag [#allocation4], %s1344
        %s1346 = sand.u32 %s139, 1
        %s1347 = smul.addr %s1346, 32
        %s1348 = scalar_lea.vmem [#allocation3], %s1347
        // Predicated region
        $region41: #{tpu_custom_call.1} parent=35 // pred_check
          %p1349 = pneg %p149
        $region42: #{tpu_custom_call.1} parent=35 // pred_check_branch
          %1351 = sbr.rel (%p1349) target = $region44
        $region43: #{tpu_custom_call.1} parent=35 // pred_region
          %s1352 = smul.u32 4, %s23
          %s1354 = ssub.s32 512, 512
          %1355 = vsyncadd %s1345, %s1354
          %s1356 = smul.addr %s22, 8
          %s1357 = sadd.s32 %s1352, %s1356
          %s1358 = smul.addr %s1357, 128
          %s1359 = scalar_lea.hbm %s4, %s1358
          %s1361 = sshll.u32 %s1348, 4
          %s1362 = int_to_ptr.vmem [resolvable:$true] %s1361
          %1364 = dma.vmem_to_hbm [thread:$0]  %s1362, 512, %s1359, %s1345
        $region44: #{tpu_custom_call.1} parent=35 // pred_fallthru
          _
      $region36: #{tpu_custom_call.1} parent=5 // pred_fallthru
        _
      %p1365 = scmp.le.s32.totalorder 2, %s13
      // Predicated region
      $region45: #{tpu_custom_call.1} parent=5 // pred_check
        %p1366 = pneg %p1365
      $region46: #{tpu_custom_call.1} parent=5 // pred_check_branch
        %1368 = sbr.rel (%p1366) target = $region48
      $region47: #{tpu_custom_call.1} parent=5 // pred_region
        %s1369 = ssub.s32 %s13, 2
        // Predicated region
        $region49: #{tpu_custom_call.1} parent=47 // pred_check
          %p1370 = pneg %p155
        $region50: #{tpu_custom_call.1} parent=47 // pred_check_branch
          %1372 = sbr.rel (%p1370) target = $region52
        $region51: #{tpu_custom_call.1} parent=47 // pred_region
          %s1373 = sand.u32 %s140, 1
          %s1374 = scalar_lea.sflag [#allocation4], %s1373
          %s1375 = sand.u32 %s140, 1
          %s1376 = smul.addr %s1375, 32
          %s1377 = scalar_lea.vmem [#allocation3], %s1376
          %1378 = dma.done %s1374, 512
        $region52: #{tpu_custom_call.1} parent=47 // pred_fallthru
          _
      $region48: #{tpu_custom_call.1} parent=5 // pred_fallthru
        _
    $region6: #{tpu_custom_call.1} parent=1 // loop_footer
      %s17 = sadd.s32 1, %s13
    $region7: #{tpu_custom_call.1} parent=1 // loop_footer_branch
      %12 = sbr.rel target = $region3
    $region8: #{tpu_custom_call.1} parent=1 // loop_exit
      _
    %1379 = vsyncpa [#allocation4], 1
    %s1380 = scalar_lea.sflag [#allocation4], 1
    %1381 = vsyncpa %s1380, 1

</llo_original>
